<compile_context>
chip_gen: v5e
topology: v5e:2x2
jax: 0.10.0
libtpu: 0.0.40
codegen_flags: <defaults>
</compile_context>

<pallas_src>
import functools

import jax
import jax.numpy as jnp
import numpy as np
from jax import lax
from jax.experimental import pallas as pl
from jax.experimental.pallas import tpu as pltpu


# ----------------------------------------------------------------------------
# Fused Pallas kernel: the whole innermost UNet block in one invocation.
# ----------------------------------------------------------------------------
def _unet_block_kernel(xe_ref, xo_ref, sdn_ref, sup_ref, wd_ref, b1_ref,
                       wu_ref, bu_ref, chan_ref, gr_ref, br_ref, o_ref,
                       *, N, H, W, Cin, Cinner, Cout):
    Wo = W // 2
    WC = W * Cin            # width of one input-row slab
    YW = Wo * Cinner        # width of one y1 row
    OW = W * Cout           # width of one output-row-parity half
    eps = 1e-5
    inv_count = 1.0 / float(N * H * W)
    f32 = jnp.float32

    s_dn = sdn_ref[...]     # [R,R]: row a -> row a-1 (zero at a==0, per batch)
    s_up = sup_ref[...]     # [R,R]: row a -> row a+1 (zero at a==Ho-1)

    # ---- LeakyReLU(0.2) on the raw input (applied once per element) --------
    xe = xe_ref[...]
    xe = jnp.where(xe > 0, xe, 0.2 * xe)        # input rows h = 2a
    xo = xo_ref[...]
    xo = jnp.where(xo > 0, xo, 0.2 * xo)        # input rows h = 2a + 1

    # Vertical taps as tiny banded matmuls (border zero padding baked in).
    xo_dn = jnp.dot(s_dn, xo, preferred_element_type=f32)   # row 2a - 1
    xe_up = jnp.dot(s_up, xe, preferred_element_type=f32)   # row 2a + 2

    # ---- down conv: 4 banded matmuls against per-kh weight slabs -----------
    y1 = jnp.dot(xo_dn, wd_ref[0], preferred_element_type=f32)
    y1 = y1 + jnp.dot(xe, wd_ref[1], preferred_element_type=f32)
    y1 = y1 + jnp.dot(xo, wd_ref[2], preferred_element_type=f32)
    y1 = y1 + jnp.dot(xe_up, wd_ref[3], preferred_element_type=f32)
    y1 = jnp.maximum(y1 + b1_ref[...], 0.0)     # bias + ReLU (once per elem)

    # ---- up path: ConvTranspose2d(k4,s2,p1) via output-row parity ----------
    y1_dn = jnp.dot(s_dn, y1, preferred_element_type=f32)    # ih = a - 1
    y1_up = jnp.dot(s_up, y1, preferred_element_type=f32)    # ih = a + 1
    bu = bu_ref[...]
    yh0 = (jnp.dot(y1, wu_ref[1], preferred_element_type=f32) +
           jnp.dot(y1_dn, wu_ref[3], preferred_element_type=f32) + bu)  # oh=2a
    yh1 = (jnp.dot(y1, wu_ref[2], preferred_element_type=f32) +
           jnp.dot(y1_up, wu_ref[0], preferred_element_type=f32) + bu)  # oh=2a+1

    # ---- fused BatchNorm2d (training mode, biased var, eps=1e-5) -----------
    chan = chan_ref[...]    # [OW,OW]: chan[i,j] = 1 iff i%Cout == j%Cout
    rsum = (jnp.sum(yh0, axis=0, keepdims=True) +
            jnp.sum(yh1, axis=0, keepdims=True))
    mrow = jnp.dot(rsum, chan, preferred_element_type=f32) * inv_count
    c0 = yh0 - mrow
    c1 = yh1 - mrow
    sqsum = (jnp.sum(c0 * c0, axis=0, keepdims=True) +
             jnp.sum(c1 * c1, axis=0, keepdims=True))
    vrow = jnp.dot(sqsum, chan, preferred_element_type=f32) * inv_count
    srow = gr_ref[...] * lax.rsqrt(vrow + eps)
    brow = br_ref[...]

    o_ref[:, 0:OW] = c0 * srow + brow            # output rows oh = 2a
    o_ref[:, OW:2 * OW] = c1 * srow + brow       # output rows oh = 2a + 1


# ----------------------------------------------------------------------------
# One-time host-side weight preprocessing (hoisted out of the forward path).
# ----------------------------------------------------------------------------
def prepare_params(params, N, H, W):
    wd = np.asarray(params["w_down"], np.float32)     # [Cinner, Cin, 4, 4] OIHW
    wu = np.asarray(params["w_up"], np.float32)       # [Cinner, Cout, 4, 4] (I,O,kH,kW)
    bd = np.asarray(params["b_down"], np.float32)
    bup = np.asarray(params["b_up"], np.float32)
    gamma = np.asarray(params["gamma"], np.float32)
    beta = np.asarray(params["beta"], np.float32)
    Cinner, Cin = wd.shape[0], wd.shape[1]
    Cout = wu.shape[1]
    Ho, Wo = H // 2, W // 2
    R = N * Ho

    # Down conv (k4,s2,p1): per-kh banded matrices [W*Cin, Wo*Cinner];
    # kw taps + width zero-padding folded into the band structure.
    wdb = np.zeros((4, W * Cin, Wo * Cinner), np.float32)
    for kh in range(4):
        for b in range(Wo):
            for kw in range(4):
                w_in = 2 * b + kw - 1
                if 0 <= w_in < W:
                    wdb[kh, w_in * Cin:(w_in + 1) * Cin,
                        b * Cinner:(b + 1) * Cinner] += wd[:, :, kh, kw].T

    # ConvTranspose (k4,s2,p1): per-kh banded matrices [Wo*Cinner, W*Cout].
    wub = np.zeros((4, Wo * Cinner, W * Cout), np.float32)
    for kh in range(4):
        for iw in range(Wo):
            for kw in range(4):
                ow = 2 * iw - 1 + kw
                if 0 <= ow < W:
                    wub[kh, iw * Cinner:(iw + 1) * Cinner,
                        ow * Cout:(ow + 1) * Cout] += wu[:, :, kh, kw]

    # Intra-batch row-shift matrices (batch/image-border zeros baked in).
    s_dn = np.zeros((R, R), np.float32)
    s_up = np.zeros((R, R), np.float32)
    for r in range(R):
        if r % Ho != 0:
            s_dn[r, r - 1] = 1.0
        if r % Ho != Ho - 1:
            s_up[r, r + 1] = 1.0

    # Channel-averaging matrix for fused BatchNorm.
    idx = np.arange(W * Cout)
    chan = (idx[:, None] % Cout == idx[None, :] % Cout).astype(np.float32)

    return {
        "s_dn": jnp.asarray(s_dn),
        "s_up": jnp.asarray(s_up),
        "w_down_band": jnp.asarray(wdb),
        "b_down_row": jnp.asarray(np.tile(bd, Wo)[None, :]),
        "w_up_band": jnp.asarray(wub),
        "b_up_row": jnp.asarray(np.tile(bup, W)[None, :]),
        "chan_avg": jnp.asarray(chan),
        "gamma_row": jnp.asarray(np.tile(gamma, W)[None, :]),
        "beta_row": jnp.asarray(np.tile(beta, W)[None, :]),
        "dims": (Cin, Cinner, Cout),
    }


def _full_spec(a):
    nd = a.ndim
    return pl.BlockSpec(tuple(a.shape), lambda *args: (0,) * nd)


# ----------------------------------------------------------------------------
# Forward wrapper (only layout plumbing outside the kernel).
# ----------------------------------------------------------------------------
def unet_block_forward(x, prep):
    """Innermost UnetSkipConnectionBlock forward. x: [N, C_in, H, W] (NCHW)."""
    x = x.astype(jnp.float32)
    N, Cin, H, W = x.shape
    _, Cinner, Cout = prep["dims"]
    Ho = H // 2
    R = N * Ho
    OW = W * Cout

    # NCHW -> even/odd input-row slabs [N*Ho, W*Cin] (pure layout plumbing).
    xr = jnp.transpose(x, (0, 2, 3, 1)).reshape(N, Ho, 2, W * Cin)
    xe2 = xr[:, :, 0, :].reshape(R, W * Cin)
    xo2 = xr[:, :, 1, :].reshape(R, W * Cin)

    in_arrays = (xe2, xo2, prep["s_dn"], prep["s_up"], prep["w_down_band"],
                 prep["b_down_row"], prep["w_up_band"], prep["b_up_row"],
                 prep["chan_avg"], prep["gamma_row"], prep["beta_row"])
    in_specs = [_full_spec(a) for a in in_arrays]

    out2d = pl.pallas_call(
        functools.partial(_unet_block_kernel, N=N, H=H, W=W,
                          Cin=Cin, Cinner=Cinner, Cout=Cout),
        out_shape=jax.ShapeDtypeStruct((R, 2 * OW), jnp.float32),
        grid_spec=pltpu.PrefetchScalarGridSpec(
            num_scalar_prefetch=0,
            grid=(1,),
            in_specs=in_specs,
            out_specs=pl.BlockSpec((R, 2 * OW), lambda i: (0, 0))),
        compiler_params=pltpu.CompilerParams(
            dimension_semantics=("arbitrary",)),
    )(*in_arrays)

    # [N*Ho, (rh, w, co)] -> NHWC -> NCHW, then skip concat with the raw input.
    y3 = out2d.reshape(N, H, W, Cout).transpose(0, 3, 1, 2)
    return jnp.concatenate([x, y3], axis=1)


# ----------------------------------------------------------------------------
# Pure-JAX reference (XLA convs) for a correctness check.
# ----------------------------------------------------------------------------
def reference_forward(x, params):
    x = x.astype(jnp.float32)
    xa = jnp.where(x > 0, x, 0.2 * x)
    dn = ("NCHW", "OIHW", "NCHW")
    y1 = lax.conv_general_dilated(xa, params["w_down"], (2, 2),
                                  ((1, 1), (1, 1)), dimension_numbers=dn,
                                  precision=lax.Precision.HIGHEST)
    y1 = y1 + params["b_down"][None, :, None, None]
    y1 = jnp.maximum(y1, 0.0)
    Wf = jnp.flip(params["w_up"], axis=(2, 3)).transpose(1, 0, 2, 3)
    y2 = lax.conv_general_dilated(y1, Wf, (1, 1), ((2, 2), (2, 2)),
                                  lhs_dilation=(2, 2), dimension_numbers=dn,
                                  precision=lax.Precision.HIGHEST)
    y2 = y2 + params["b_up"][None, :, None, None]
    mean = y2.mean(axis=(0, 2, 3), keepdims=True)
    var = ((y2 - mean) ** 2).mean(axis=(0, 2, 3), keepdims=True)
    y3 = (y2 - mean) * lax.rsqrt(var + 1e-5)
    y3 = y3 * params["gamma"][None, :, None, None] + params["beta"][None, :, None, None]
    return jnp.concatenate([x, y3], axis=1)


# ----------------------------------------------------------------------------
if __name__ == "__main__":
    # Innermost block: input_nc defaults to outer_nc.
    outer_nc, inner_nc = 4, 8
    N, H, W = 2, 16, 16

    key = jax.random.PRNGKey(0)
    k1, k2, k3, k4, k5, k6, kx = jax.random.split(key, 7)
    params = {
        # Conv2d(input_nc -> inner_nc, k=4, s=2, p=1, bias=True): OIHW
        "w_down": 0.1 * jax.random.normal(k1, (inner_nc, outer_nc, 4, 4), jnp.float32),
        "b_down": 0.1 * jax.random.normal(k2, (inner_nc,), jnp.float32),
        # ConvTranspose2d(inner_nc -> outer_nc, k=4, s=2, p=1, bias=True): (in, out, kH, kW)
        "w_up": 0.1 * jax.random.normal(k3, (inner_nc, outer_nc, 4, 4), jnp.float32),
        "b_up": 0.1 * jax.random.normal(k4, (outer_nc,), jnp.float32),
        # BatchNorm2d(outer_nc) affine params
        "gamma": 1.0 + 0.1 * jax.random.normal(k5, (outer_nc,), jnp.float32),
        "beta": 0.1 * jax.random.normal(k6, (outer_nc,), jnp.float32),
    }
    x = jax.random.normal(kx, (N, outer_nc, H, W), jnp.float32)

    prep = prepare_params(params, N, H, W)       # one-time weight preprocessing
    fwd = jax.jit(functools.partial(unet_block_forward, prep=prep))

    out = jax.block_until_ready(fwd(x))
    ref = jax.block_until_ready(reference_forward(x, params))

    assert out.shape == (N, 2 * outer_nc, H, W), out.shape
    np.testing.assert_allclose(np.asarray(out), np.asarray(ref),
                               atol=2e-3, rtol=2e-3)
    print("KERNEL_OK")
</pallas_src>

<mosaic_0001>
module attributes {stable_mosaic.version = 11 : i64} {
  func.func @_unet_block_kernel(%arg0: i32, %arg1: memref<16x64xf32, #tpu.memory_space<vmem>>, %arg2: memref<16x64xf32, #tpu.memory_space<vmem>>, %arg3: memref<16x16xf32, #tpu.memory_space<vmem>>, %arg4: memref<16x16xf32, #tpu.memory_space<vmem>>, %arg5: memref<4x64x64xf32, #tpu.memory_space<vmem>>, %arg6: memref<1x64xf32, #tpu.memory_space<vmem>>, %arg7: memref<4x64x64xf32, #tpu.memory_space<vmem>>, %arg8: memref<1x64xf32, #tpu.memory_space<vmem>>, %arg9: memref<64x64xf32, #tpu.memory_space<vmem>>, %arg10: memref<1x64xf32, #tpu.memory_space<vmem>>, %arg11: memref<1x64xf32, #tpu.memory_space<vmem>>, %arg12: memref<16x128xf32, #tpu.memory_space<vmem>>) attributes {dimension_semantics = [#tpu.dimension_semantics<arbitrary>], iteration_bounds = array<i64: 1>, scalar_prefetch = 0 : i64, scratch_operands = 0 : i64, tpu.core_type = #tpu.core_type<tc>, window_params = [{pipeline_mode = #tpu.pipeline_mode<synchronous>, transform_indices = @transform_0, window_bounds = array<i64: 16, 64>}, {pipeline_mode = #tpu.pipeline_mode<synchronous>, transform_indices = @transform_1, window_bounds = array<i64: 16, 64>}, {pipeline_mode = #tpu.pipeline_mode<synchronous>, transform_indices = @transform_2, window_bounds = array<i64: 16, 16>}, {pipeline_mode = #tpu.pipeline_mode<synchronous>, transform_indices = @transform_3, window_bounds = array<i64: 16, 16>}, {pipeline_mode = #tpu.pipeline_mode<synchronous>, transform_indices = @transform_4, window_bounds = array<i64: 4, 64, 64>}, {pipeline_mode = #tpu.pipeline_mode<synchronous>, transform_indices = @transform_5, window_bounds = array<i64: 1, 64>}, {pipeline_mode = #tpu.pipeline_mode<synchronous>, transform_indices = @transform_6, window_bounds = array<i64: 4, 64, 64>}, {pipeline_mode = #tpu.pipeline_mode<synchronous>, transform_indices = @transform_7, window_bounds = array<i64: 1, 64>}, {pipeline_mode = #tpu.pipeline_mode<synchronous>, transform_indices = @transform_8, window_bounds = array<i64: 64, 64>}, {pipeline_mode = #tpu.pipeline_mode<synchronous>, transform_indices = @transform_9, window_bounds = array<i64: 1, 64>}, {pipeline_mode = #tpu.pipeline_mode<synchronous>, transform_indices = @transform_10, window_bounds = array<i64: 1, 64>}, {pipeline_mode = #tpu.pipeline_mode<synchronous>, transform_indices = @transform_11, window_bounds = array<i64: 16, 128>}]} {
    %c0 = arith.constant 0 : index
    %c0_0 = arith.constant 0 : index
    %0 = vector.load %arg3[%c0, %c0_0] : memref<16x16xf32, #tpu.memory_space<vmem>>, vector<16x16xf32>
    %c0_1 = arith.constant 0 : index
    %c0_2 = arith.constant 0 : index
    %1 = vector.load %arg4[%c0_1, %c0_2] : memref<16x16xf32, #tpu.memory_space<vmem>>, vector<16x16xf32>
    %c0_3 = arith.constant 0 : index
    %c0_4 = arith.constant 0 : index
    %2 = vector.load %arg1[%c0_3, %c0_4] : memref<16x64xf32, #tpu.memory_space<vmem>>, vector<16x64xf32>
    %cst = arith.constant 0.000000e+00 : f32
    %3 = vector.broadcast %cst : f32 to vector<16x64xf32>
    %4 = arith.cmpf ogt, %2, %3 : vector<16x64xf32>
    %cst_5 = arith.constant 2.000000e-01 : f32
    %5 = vector.broadcast %cst_5 : f32 to vector<16x64xf32>
    %6 = arith.mulf %5, %2 : vector<16x64xf32>
    %7 = arith.select %4, %2, %6 : vector<16x64xi1>, vector<16x64xf32>
    %c0_6 = arith.constant 0 : index
    %c0_7 = arith.constant 0 : index
    %8 = vector.load %arg2[%c0_6, %c0_7] : memref<16x64xf32, #tpu.memory_space<vmem>>, vector<16x64xf32>
    %cst_8 = arith.constant 0.000000e+00 : f32
    %9 = vector.broadcast %cst_8 : f32 to vector<16x64xf32>
    %10 = arith.cmpf ogt, %8, %9 : vector<16x64xf32>
    %cst_9 = arith.constant 2.000000e-01 : f32
    %11 = vector.broadcast %cst_9 : f32 to vector<16x64xf32>
    %12 = arith.mulf %11, %8 : vector<16x64xf32>
    %13 = arith.select %10, %8, %12 : vector<16x64xi1>, vector<16x64xf32>
    %cst_10 = arith.constant dense<0.000000e+00> : vector<16x64xf32>
    %14 = tpu.matmul %0, %13, %cst_10 {dimension_numbers = #tpu.dot_dimension_numbers<[1], [0], [0], [1], [0, 0, 1, 1], [], []>} : vector<16x16xf32>, vector<16x64xf32>, vector<16x64xf32> -> vector<16x64xf32>
    %cst_11 = arith.constant dense<0.000000e+00> : vector<16x64xf32>
    %15 = tpu.matmul %1, %7, %cst_11 {dimension_numbers = #tpu.dot_dimension_numbers<[1], [0], [0], [1], [0, 0, 1, 1], [], []>} : vector<16x16xf32>, vector<16x64xf32>, vector<16x64xf32> -> vector<16x64xf32>
    %c0_12 = arith.constant 0 : index
    %c0_13 = arith.constant 0 : index
    %c0_14 = arith.constant 0 : index
    %16 = vector.load %arg5[%c0_12, %c0_13, %c0_14] : memref<4x64x64xf32, #tpu.memory_space<vmem>>, vector<1x64x64xf32>
    %17 = vector.shape_cast %16 : vector<1x64x64xf32> to vector<64x64xf32>
    %cst_15 = arith.constant dense<0.000000e+00> : vector<16x64xf32>
    %18 = tpu.matmul %14, %17, %cst_15 {dimension_numbers = #tpu.dot_dimension_numbers<[1], [0], [0], [1], [0, 0, 1, 1], [], []>} : vector<16x64xf32>, vector<64x64xf32>, vector<16x64xf32> -> vector<16x64xf32>
    %c1 = arith.constant 1 : index
    %c0_16 = arith.constant 0 : index
    %c0_17 = arith.constant 0 : index
    %19 = vector.load %arg5[%c1, %c0_16, %c0_17] : memref<4x64x64xf32, #tpu.memory_space<vmem>>, vector<1x64x64xf32>
    %20 = vector.shape_cast %19 : vector<1x64x64xf32> to vector<64x64xf32>
    %cst_18 = arith.constant dense<0.000000e+00> : vector<16x64xf32>
    %21 = tpu.matmul %7, %20, %cst_18 {dimension_numbers = #tpu.dot_dimension_numbers<[1], [0], [0], [1], [0, 0, 1, 1], [], []>} : vector<16x64xf32>, vector<64x64xf32>, vector<16x64xf32> -> vector<16x64xf32>
    %22 = arith.addf %18, %21 : vector<16x64xf32>
    %c2 = arith.constant 2 : index
    %c0_19 = arith.constant 0 : index
    %c0_20 = arith.constant 0 : index
    %23 = vector.load %arg5[%c2, %c0_19, %c0_20] : memref<4x64x64xf32, #tpu.memory_space<vmem>>, vector<1x64x64xf32>
    %24 = vector.shape_cast %23 : vector<1x64x64xf32> to vector<64x64xf32>
    %cst_21 = arith.constant dense<0.000000e+00> : vector<16x64xf32>
    %25 = tpu.matmul %13, %24, %cst_21 {dimension_numbers = #tpu.dot_dimension_numbers<[1], [0], [0], [1], [0, 0, 1, 1], [], []>} : vector<16x64xf32>, vector<64x64xf32>, vector<16x64xf32> -> vector<16x64xf32>
    %26 = arith.addf %22, %25 : vector<16x64xf32>
    %c3 = arith.constant 3 : index
    %c0_22 = arith.constant 0 : index
    %c0_23 = arith.constant 0 : index
    %27 = vector.load %arg5[%c3, %c0_22, %c0_23] : memref<4x64x64xf32, #tpu.memory_space<vmem>>, vector<1x64x64xf32>
    %28 = vector.shape_cast %27 : vector<1x64x64xf32> to vector<64x64xf32>
    %cst_24 = arith.constant dense<0.000000e+00> : vector<16x64xf32>
    %29 = tpu.matmul %15, %28, %cst_24 {dimension_numbers = #tpu.dot_dimension_numbers<[1], [0], [0], [1], [0, 0, 1, 1], [], []>} : vector<16x64xf32>, vector<64x64xf32>, vector<16x64xf32> -> vector<16x64xf32>
    %30 = arith.addf %26, %29 : vector<16x64xf32>
    %c0_25 = arith.constant 0 : index
    %c0_26 = arith.constant 0 : index
    %31 = vector.load %arg6[%c0_25, %c0_26] : memref<1x64xf32, #tpu.memory_space<vmem>>, vector<1x64xf32>
    %32 = vector.broadcast %31 : vector<1x64xf32> to vector<16x64xf32>
    %33 = arith.addf %30, %32 : vector<16x64xf32>
    %cst_27 = arith.constant 0.000000e+00 : f32
    %34 = vector.broadcast %cst_27 : f32 to vector<16x64xf32>
    %35 = arith.maximumf %33, %34 : vector<16x64xf32>
    %cst_28 = arith.constant dense<0.000000e+00> : vector<16x64xf32>
    %36 = tpu.matmul %0, %35, %cst_28 {dimension_numbers = #tpu.dot_dimension_numbers<[1], [0], [0], [1], [0, 0, 1, 1], [], []>} : vector<16x16xf32>, vector<16x64xf32>, vector<16x64xf32> -> vector<16x64xf32>
    %cst_29 = arith.constant dense<0.000000e+00> : vector<16x64xf32>
    %37 = tpu.matmul %1, %35, %cst_29 {dimension_numbers = #tpu.dot_dimension_numbers<[1], [0], [0], [1], [0, 0, 1, 1], [], []>} : vector<16x16xf32>, vector<16x64xf32>, vector<16x64xf32> -> vector<16x64xf32>
    %c0_30 = arith.constant 0 : index
    %c0_31 = arith.constant 0 : index
    %38 = vector.load %arg8[%c0_30, %c0_31] : memref<1x64xf32, #tpu.memory_space<vmem>>, vector<1x64xf32>
    %c1_32 = arith.constant 1 : index
    %c0_33 = arith.constant 0 : index
    %c0_34 = arith.constant 0 : index
    %39 = vector.load %arg7[%c1_32, %c0_33, %c0_34] : memref<4x64x64xf32, #tpu.memory_space<vmem>>, vector<1x64x64xf32>
    %40 = vector.shape_cast %39 : vector<1x64x64xf32> to vector<64x64xf32>
    %cst_35 = arith.constant dense<0.000000e+00> : vector<16x64xf32>
    %41 = tpu.matmul %35, %40, %cst_35 {dimension_numbers = #tpu.dot_dimension_numbers<[1], [0], [0], [1], [0, 0, 1, 1], [], []>} : vector<16x64xf32>, vector<64x64xf32>, vector<16x64xf32> -> vector<16x64xf32>
    %c3_36 = arith.constant 3 : index
    %c0_37 = arith.constant 0 : index
    %c0_38 = arith.constant 0 : index
    %42 = vector.load %arg7[%c3_36, %c0_37, %c0_38] : memref<4x64x64xf32, #tpu.memory_space<vmem>>, vector<1x64x64xf32>
    %43 = vector.shape_cast %42 : vector<1x64x64xf32> to vector<64x64xf32>
    %cst_39 = arith.constant dense<0.000000e+00> : vector<16x64xf32>
    %44 = tpu.matmul %36, %43, %cst_39 {dimension_numbers = #tpu.dot_dimension_numbers<[1], [0], [0], [1], [0, 0, 1, 1], [], []>} : vector<16x64xf32>, vector<64x64xf32>, vector<16x64xf32> -> vector<16x64xf32>
    %45 = arith.addf %41, %44 : vector<16x64xf32>
    %46 = vector.broadcast %38 : vector<1x64xf32> to vector<16x64xf32>
    %47 = arith.addf %45, %46 : vector<16x64xf32>
    %c2_40 = arith.constant 2 : index
    %c0_41 = arith.constant 0 : index
    %c0_42 = arith.constant 0 : index
    %48 = vector.load %arg7[%c2_40, %c0_41, %c0_42] : memref<4x64x64xf32, #tpu.memory_space<vmem>>, vector<1x64x64xf32>
    %49 = vector.shape_cast %48 : vector<1x64x64xf32> to vector<64x64xf32>
    %cst_43 = arith.constant dense<0.000000e+00> : vector<16x64xf32>
    %50 = tpu.matmul %35, %49, %cst_43 {dimension_numbers = #tpu.dot_dimension_numbers<[1], [0], [0], [1], [0, 0, 1, 1], [], []>} : vector<16x64xf32>, vector<64x64xf32>, vector<16x64xf32> -> vector<16x64xf32>
    %c0_44 = arith.constant 0 : index
    %c0_45 = arith.constant 0 : index
    %c0_46 = arith.constant 0 : index
    %51 = vector.load %arg7[%c0_44, %c0_45, %c0_46] : memref<4x64x64xf32, #tpu.memory_space<vmem>>, vector<1x64x64xf32>
    %52 = vector.shape_cast %51 : vector<1x64x64xf32> to vector<64x64xf32>
    %cst_47 = arith.constant dense<0.000000e+00> : vector<16x64xf32>
    %53 = tpu.matmul %37, %52, %cst_47 {dimension_numbers = #tpu.dot_dimension_numbers<[1], [0], [0], [1], [0, 0, 1, 1], [], []>} : vector<16x64xf32>, vector<64x64xf32>, vector<16x64xf32> -> vector<16x64xf32>
    %54 = arith.addf %50, %53 : vector<16x64xf32>
    %55 = vector.broadcast %38 : vector<1x64xf32> to vector<16x64xf32>
    %56 = arith.addf %54, %55 : vector<16x64xf32>
    %c0_48 = arith.constant 0 : index
    %c0_49 = arith.constant 0 : index
    %57 = vector.load %arg9[%c0_48, %c0_49] : memref<64x64xf32, #tpu.memory_space<vmem>>, vector<64x64xf32>
    %cst_50 = arith.constant dense<0.000000e+00> : vector<64xf32>
    %58 = vector.multi_reduction <add>, %47, %cst_50 [0] : vector<16x64xf32> to vector<64xf32>
    %59 = vector.shape_cast %58 : vector<64xf32> to vector<1x64xf32>
    %cst_51 = arith.constant dense<0.000000e+00> : vector<64xf32>
    %60 = vector.multi_reduction <add>, %56, %cst_51 [0] : vector<16x64xf32> to vector<64xf32>
    %61 = vector.shape_cast %60 : vector<64xf32> to vector<1x64xf32>
    %62 = arith.addf %59, %61 : vector<1x64xf32>
    %cst_52 = arith.constant dense<0.000000e+00> : vector<1x64xf32>
    %63 = tpu.matmul %62, %57, %cst_52 {dimension_numbers = #tpu.dot_dimension_numbers<[1], [0], [0], [1], [0, 0, 1, 1], [], []>} : vector<1x64xf32>, vector<64x64xf32>, vector<1x64xf32> -> vector<1x64xf32>
    %cst_53 = arith.constant 0.001953125 : f32
    %64 = vector.broadcast %cst_53 : f32 to vector<1x64xf32>
    %65 = arith.mulf %63, %64 : vector<1x64xf32>
    %66 = vector.broadcast %65 : vector<1x64xf32> to vector<16x64xf32>
    %67 = arith.subf %47, %66 : vector<16x64xf32>
    %68 = vector.broadcast %65 : vector<1x64xf32> to vector<16x64xf32>
    %69 = arith.subf %56, %68 : vector<16x64xf32>
    %70 = arith.mulf %67, %67 : vector<16x64xf32>
    %cst_54 = arith.constant dense<0.000000e+00> : vector<64xf32>
    %71 = vector.multi_reduction <add>, %70, %cst_54 [0] : vector<16x64xf32> to vector<64xf32>
    %72 = vector.shape_cast %71 : vector<64xf32> to vector<1x64xf32>
    %73 = arith.mulf %69, %69 : vector<16x64xf32>
    %cst_55 = arith.constant dense<0.000000e+00> : vector<64xf32>
    %74 = vector.multi_reduction <add>, %73, %cst_55 [0] : vector<16x64xf32> to vector<64xf32>
    %75 = vector.shape_cast %74 : vector<64xf32> to vector<1x64xf32>
    %76 = arith.addf %72, %75 : vector<1x64xf32>
    %cst_56 = arith.constant dense<0.000000e+00> : vector<1x64xf32>
    %77 = tpu.matmul %76, %57, %cst_56 {dimension_numbers = #tpu.dot_dimension_numbers<[1], [0], [0], [1], [0, 0, 1, 1], [], []>} : vector<1x64xf32>, vector<64x64xf32>, vector<1x64xf32> -> vector<1x64xf32>
    %cst_57 = arith.constant 0.001953125 : f32
    %78 = vector.broadcast %cst_57 : f32 to vector<1x64xf32>
    %79 = arith.mulf %77, %78 : vector<1x64xf32>
    %c0_58 = arith.constant 0 : index
    %c0_59 = arith.constant 0 : index
    %80 = vector.load %arg10[%c0_58, %c0_59] : memref<1x64xf32, #tpu.memory_space<vmem>>, vector<1x64xf32>
    %cst_60 = arith.constant 9.99999974E-6 : f32
    %81 = vector.broadcast %cst_60 : f32 to vector<1x64xf32>
    %82 = arith.addf %79, %81 : vector<1x64xf32>
    %83 = math.rsqrt %82 : vector<1x64xf32>
    %84 = arith.mulf %80, %83 : vector<1x64xf32>
    %c0_61 = arith.constant 0 : index
    %c0_62 = arith.constant 0 : index
    %85 = vector.load %arg11[%c0_61, %c0_62] : memref<1x64xf32, #tpu.memory_space<vmem>>, vector<1x64xf32>
    %86 = vector.broadcast %84 : vector<1x64xf32> to vector<16x64xf32>
    %87 = arith.mulf %67, %86 : vector<16x64xf32>
    %88 = vector.broadcast %85 : vector<1x64xf32> to vector<16x64xf32>
    %89 = arith.addf %87, %88 : vector<16x64xf32>
    %c0_63 = arith.constant 0 : index
    %c0_64 = arith.constant 0 : index
    %90 = vector.load %arg12[%c0_63, %c0_64] : memref<16x128xf32, #tpu.memory_space<vmem>>, vector<16x64xf32>
    tpu.vector_store %arg12[%c0_63, %c0_64], %89 {strides = array<i32>} : memref<16x128xf32, #tpu.memory_space<vmem>>, vector<16x64xf32>,
    %91 = vector.broadcast %84 : vector<1x64xf32> to vector<16x64xf32>
    %92 = arith.mulf %69, %91 : vector<16x64xf32>
    %93 = vector.broadcast %85 : vector<1x64xf32> to vector<16x64xf32>
    %94 = arith.addf %92, %93 : vector<16x64xf32>
    %c0_65 = arith.constant 0 : index
    %c64 = arith.constant 64 : index
    %95 = vector.load %arg12[%c0_65, %c64] : memref<16x128xf32, #tpu.memory_space<vmem>>, vector<16x64xf32>
    tpu.vector_store %arg12[%c0_65, %c64], %94 {strides = array<i32>} : memref<16x128xf32, #tpu.memory_space<vmem>>, vector<16x64xf32>,
    return
  }
  func.func @transform_0(%arg0: i32) -> (i32, i32) {
    %c0_i32 = arith.constant 0 : i32
    %c0_i32_0 = arith.constant 0 : i32
    %c0_i32_1 = arith.constant 0 : i32
    return %c0_i32, %c0_i32_0 : i32, i32
  }
  func.func @transform_1(%arg0: i32) -> (i32, i32) {
    %c0_i32 = arith.constant 0 : i32
    %c0_i32_0 = arith.constant 0 : i32
    %c0_i32_1 = arith.constant 0 : i32
    return %c0_i32, %c0_i32_0 : i32, i32
  }
  func.func @transform_2(%arg0: i32) -> (i32, i32) {
    %c0_i32 = arith.constant 0 : i32
    %c0_i32_0 = arith.constant 0 : i32
    %c0_i32_1 = arith.constant 0 : i32
    return %c0_i32, %c0_i32_0 : i32, i32
  }
  func.func @transform_3(%arg0: i32) -> (i32, i32) {
    %c0_i32 = arith.constant 0 : i32
    %c0_i32_0 = arith.constant 0 : i32
    %c0_i32_1 = arith.constant 0 : i32
    return %c0_i32, %c0_i32_0 : i32, i32
  }
  func.func @transform_4(%arg0: i32) -> (i32, i32, i32) {
    %c0_i32 = arith.constant 0 : i32
    %c0_i32_0 = arith.constant 0 : i32
    %c0_i32_1 = arith.constant 0 : i32
    %c0_i32_2 = arith.constant 0 : i32
    return %c0_i32, %c0_i32_0, %c0_i32_1 : i32, i32, i32
  }
  func.func @transform_5(%arg0: i32) -> (i32, i32) {
    %c0_i32 = arith.constant 0 : i32
    %c0_i32_0 = arith.constant 0 : i32
    %c0_i32_1 = arith.constant 0 : i32
    return %c0_i32, %c0_i32_0 : i32, i32
  }
  func.func @transform_6(%arg0: i32) -> (i32, i32, i32) {
    %c0_i32 = arith.constant 0 : i32
    %c0_i32_0 = arith.constant 0 : i32
    %c0_i32_1 = arith.constant 0 : i32
    %c0_i32_2 = arith.constant 0 : i32
    return %c0_i32, %c0_i32_0, %c0_i32_1 : i32, i32, i32
  }
  func.func @transform_7(%arg0: i32) -> (i32, i32) {
    %c0_i32 = arith.constant 0 : i32
    %c0_i32_0 = arith.constant 0 : i32
    %c0_i32_1 = arith.constant 0 : i32
    return %c0_i32, %c0_i32_0 : i32, i32
  }
  func.func @transform_8(%arg0: i32) -> (i32, i32) {
    %c0_i32 = arith.constant 0 : i32
    %c0_i32_0 = arith.constant 0 : i32
    %c0_i32_1 = arith.constant 0 : i32
    return %c0_i32, %c0_i32_0 : i32, i32
  }
  func.func @transform_9(%arg0: i32) -> (i32, i32) {
    %c0_i32 = arith.constant 0 : i32
    %c0_i32_0 = arith.constant 0 : i32
    %c0_i32_1 = arith.constant 0 : i32
    return %c0_i32, %c0_i32_0 : i32, i32
  }
  func.func @transform_10(%arg0: i32) -> (i32, i32) {
    %c0_i32 = arith.constant 0 : i32
    %c0_i32_0 = arith.constant 0 : i32
    %c0_i32_1 = arith.constant 0 : i32
    return %c0_i32, %c0_i32_0 : i32, i32
  }
  func.func @transform_11(%arg0: i32) -> (i32, i32) {
    %c0_i32 = arith.constant 0 : i32
    %c0_i32_0 = arith.constant 0 : i32
    %c0_i32_1 = arith.constant 0 : i32
    return %c0_i32, %c0_i32_0 : i32, i32
  }
}

</mosaic_0001>

<llo_original>
// kernel: unet_block_forward.1
$region0: #{unet_block_forward.1}
  #allocation0 [shape = 'u32[]', space=smem, size = 0x4, offset = 0x4, fixed_abs, tag = 'smem constant byte address 0x4 - core index']
  #allocation1 [shape = 'u32[72,128]{1,0:T(1,128)}', space=vmem, size = 0x9000, scoped, tag = 'internal scratch']
  %s0 = inlined_call_operand.vmem [shape: f32[16,64], index: 0, kind: input, shape index: {}]
  %s1 = inlined_call_operand.vmem [shape: f32[16,64], index: 1, kind: input, shape index: {}]
  %s2 = inlined_call_operand.vmem [shape: f32[16,16], index: 2, kind: input, shape index: {}]
  %s3 = inlined_call_operand.vmem [shape: f32[16,16], index: 3, kind: input, shape index: {}]
  %s4 = inlined_call_operand.vmem [shape: f32[4,64,64], index: 4, kind: input, shape index: {}]
  %s5 = inlined_call_operand.vmem [shape: f32[1,64], index: 5, kind: input, shape index: {}]
  %s6 = inlined_call_operand.vmem [shape: f32[4,64,64], index: 6, kind: input, shape index: {}]
  %s7 = inlined_call_operand.vmem [shape: f32[1,64], index: 7, kind: input, shape index: {}]
  %s8 = inlined_call_operand.vmem [shape: f32[64,64], index: 8, kind: input, shape index: {}]
  %s9 = inlined_call_operand.vmem [shape: f32[1,64], index: 9, kind: input, shape index: {}]
  %s10 = inlined_call_operand.vmem [shape: f32[1,64], index: 10, kind: input, shape index: {}]
  %s11 = inlined_call_operand.vmem [shape: f32[16,128], index: 11, kind: output, shape index: {}]
  %s12 = sld [smem:[#allocation0]]
  $region54: #{unet_block_forward.1} parent=0
    _
  %s14 = ssub.s32 1, %s12
  %s15 = scalar_select 0, %s14, %s12
  // Predicated region
  $region2: #{unet_block_forward.1} parent=0 // pred_check
    _
  $region3: #{unet_block_forward.1} parent=0 // pred_check_branch
    %17 = sbr.rel (0) target = $region5
  $region4: #{unet_block_forward.1} parent=0 // pred_region
    _
  $region5: #{unet_block_forward.1} parent=0 // pred_fallthru
    _
  // Predicated region
  $region6: #{unet_block_forward.1} parent=0 // pred_check
    _
  $region7: #{unet_block_forward.1} parent=0 // pred_check_branch
    %19 = sbr.rel (0) target = $region9
  $region8: #{unet_block_forward.1} parent=0 // pred_region
    _
  $region9: #{unet_block_forward.1} parent=0 // pred_fallthru
    _
  // Predicated region
  $region10: #{unet_block_forward.1} parent=0 // pred_check
    _
  $region11: #{unet_block_forward.1} parent=0 // pred_check_branch
    %21 = sbr.rel (0) target = $region13
  $region12: #{unet_block_forward.1} parent=0 // pred_region
    _
  $region13: #{unet_block_forward.1} parent=0 // pred_fallthru
    _
  // Predicated region
  $region14: #{unet_block_forward.1} parent=0 // pred_check
    _
  $region15: #{unet_block_forward.1} parent=0 // pred_check_branch
    %23 = sbr.rel (0) target = $region17
  $region16: #{unet_block_forward.1} parent=0 // pred_region
    _
  $region17: #{unet_block_forward.1} parent=0 // pred_fallthru
    _
  // Predicated region
  $region18: #{unet_block_forward.1} parent=0 // pred_check
    _
  $region19: #{unet_block_forward.1} parent=0 // pred_check_branch
    %25 = sbr.rel (0) target = $region21
  $region20: #{unet_block_forward.1} parent=0 // pred_region
    _
  $region21: #{unet_block_forward.1} parent=0 // pred_fallthru
    _
  // Predicated region
  $region22: #{unet_block_forward.1} parent=0 // pred_check
    _
  $region23: #{unet_block_forward.1} parent=0 // pred_check_branch
    %27 = sbr.rel (0) target = $region25
  $region24: #{unet_block_forward.1} parent=0 // pred_region
    _
  $region25: #{unet_block_forward.1} parent=0 // pred_fallthru
    _
  // Predicated region
  $region26: #{unet_block_forward.1} parent=0 // pred_check
    _
  $region27: #{unet_block_forward.1} parent=0 // pred_check_branch
    %29 = sbr.rel (0) target = $region29
  $region28: #{unet_block_forward.1} parent=0 // pred_region
    _
  $region29: #{unet_block_forward.1} parent=0 // pred_fallthru
    _
  // Predicated region
  $region30: #{unet_block_forward.1} parent=0 // pred_check
    _
  $region31: #{unet_block_forward.1} parent=0 // pred_check_branch
    %31 = sbr.rel (0) target = $region33
  $region32: #{unet_block_forward.1} parent=0 // pred_region
    _
  $region33: #{unet_block_forward.1} parent=0 // pred_fallthru
    _
  // Predicated region
  $region34: #{unet_block_forward.1} parent=0 // pred_check
    _
  $region35: #{unet_block_forward.1} parent=0 // pred_check_branch
    %33 = sbr.rel (0) target = $region37
  $region36: #{unet_block_forward.1} parent=0 // pred_region
    _
  $region37: #{unet_block_forward.1} parent=0 // pred_fallthru
    _
  // Predicated region
  $region38: #{unet_block_forward.1} parent=0 // pred_check
    _
  $region39: #{unet_block_forward.1} parent=0 // pred_check_branch
    %35 = sbr.rel (0) target = $region41
  $region40: #{unet_block_forward.1} parent=0 // pred_region
    _
  $region41: #{unet_block_forward.1} parent=0 // pred_fallthru
    _
  // Predicated region
  $region42: #{unet_block_forward.1} parent=0 // pred_check
    _
  $region43: #{unet_block_forward.1} parent=0 // pred_check_branch
    %37 = sbr.rel (0) target = $region45
  $region44: #{unet_block_forward.1} parent=0 // pred_region
    _
  $region45: #{unet_block_forward.1} parent=0 // pred_fallthru
    _
  %v38 = vld [vmem:[%s2] sm:$0xff]
  %v39 = vld [vmem:[%s2 + $0x8] sm:$0xff]
  %v40 = vld [vmem:[%s3] sm:$0xff]
  %v41 = vld [vmem:[%s3 + $0x8] sm:$0xff]
  %v42 = vld [vmem:[%s0] sm:$0xff]
  %v43 = vld [vmem:[%s0 + $0x8] sm:$0xff]
  %vm44 = vcmp.gt.f32.partialorder %v42, 0.0
  %vm45 = vcmp.gt.f32.partialorder %v43, 0.0
  %v46 = vmul.f32 %v42, 0.2
  %v47 = vmul.f32 %v43, 0.2
  %v48 = vsel %vm44, %v42, %v46
  %v49 = vsel %vm45, %v43, %v47
  %v50 = vld [vmem:[%s1] sm:$0xff]
  %v51 = vld [vmem:[%s1 + $0x8] sm:$0xff]
  %vm52 = vcmp.gt.f32.partialorder %v50, 0.0
  %vm53 = vcmp.gt.f32.partialorder %v51, 0.0
  %v54 = vmul.f32 %v50, 0.2
  %v55 = vmul.f32 %v51, 0.2
  %v56 = vsel %vm52, %v50, %v54
  %v57 = vsel %vm53, %v51, %v55
  %vm58 = vcmask 130048
  %v60 = vsel %vm58, %v38, 0
  %v63 = vsel %vm58, %v39, 0
  %65 = vmatpush.msra.mxu0 0.0
  %66 = vmatpush.msra.mxu0 0.0
  %67 = vmatpush.msra.mxu0 0.0
  %68 = vmatpush.msra.mxu0 0.0
  %69 = vmatpush.msra.mxu0 0.0
  %70 = vmatpush.msra.mxu0 0.0
  %71 = vmatpush.msra.mxu0 0.0
  %72 = vmatpush.msra.mxu0 0.0
  %73 = vmatpush.msra.mxu0 0.0
  %74 = vmatpush.msra.mxu0 0.0
  %75 = vmatpush.msra.mxu0 0.0
  %76 = vmatpush.msra.mxu0 0.0
  %77 = vmatpush.msra.mxu0 0.0
  %78 = vmatpush.msra.mxu0 0.0
  %79 = vmatpush.msra.mxu0 %v57
  %80 = vmatpush.msra.mxu0 %v56
  %81 = vmatmul.f32.gmra.mxu0 %v60
  %v82 = vpop.f32.mrf.mxu0
  %v83 = vadd.f32 0.0, %v82
  %84 = vmatmul.f32.gmra.mxu0 %v63
  %v85 = vpop.f32.mrf.mxu0
  %v86 = vadd.f32 0.0, %v85
  %87 = vdwg.mxu0
  %v89 = vsel %vm58, %v40, 0
  %v92 = vsel %vm58, %v41, 0
  %94 = vmatpush.msra.mxu0 0.0
  %95 = vmatpush.msra.mxu0 0.0
  %96 = vmatpush.msra.mxu0 0.0
  %97 = vmatpush.msra.mxu0 0.0
  %98 = vmatpush.msra.mxu0 0.0
  %99 = vmatpush.msra.mxu0 0.0
  %100 = vmatpush.msra.mxu0 0.0
  %101 = vmatpush.msra.mxu0 0.0
  %102 = vmatpush.msra.mxu0 0.0
  %103 = vmatpush.msra.mxu0 0.0
  %104 = vmatpush.msra.mxu0 0.0
  %105 = vmatpush.msra.mxu0 0.0
  %106 = vmatpush.msra.mxu0 0.0
  %107 = vmatpush.msra.mxu0 0.0
  %108 = vmatpush.msra.mxu0 %v49
  %109 = vmatpush.msra.mxu0 %v48
  %110 = vmatmul.f32.gmra.mxu0 %v89
  %v111 = vpop.f32.mrf.mxu0
  %v112 = vadd.f32 0.0, %v111
  %113 = vmatmul.f32.gmra.mxu0 %v92
  %v114 = vpop.f32.mrf.mxu0
  %v115 = vadd.f32 0.0, %v114
  %116 = vdwg.mxu0
  %v117 = vld [vmem:[%s4] sm:$0xff]
  %v118 = vld [vmem:[%s4 + $0x8] sm:$0xff]
  %v119 = vld [vmem:[%s4 + $0x10] sm:$0xff]
  %v120 = vld [vmem:[%s4 + $0x18] sm:$0xff]
  %v121 = vld [vmem:[%s4 + $0x20] sm:$0xff]
  %v122 = vld [vmem:[%s4 + $0x28] sm:$0xff]
  %v123 = vld [vmem:[%s4 + $0x30] sm:$0xff]
  %v124 = vld [vmem:[%s4 + $0x38] sm:$0xff]
  %s125 = scalar_lea.vmem %s4, 64
  %v126 = vld [vmem:[%s125] sm:$0xff]
  %v127 = vld [vmem:[%s125 + $0x8] sm:$0xff]
  %v128 = vld [vmem:[%s125 + $0x10] sm:$0xff]
  %v129 = vld [vmem:[%s125 + $0x18] sm:$0xff]
  %v130 = vld [vmem:[%s125 + $0x20] sm:$0xff]
  %v131 = vld [vmem:[%s125 + $0x28] sm:$0xff]
  %v132 = vld [vmem:[%s125 + $0x30] sm:$0xff]
  %v133 = vld [vmem:[%s125 + $0x38] sm:$0xff]
  %vm134 = vcmask 523264
  %v136 = vsel %vm134, %v48, 0
  %v139 = vsel %vm134, %v49, 0
  %141 = vmatpush.msra.mxu0 0.0
  %142 = vmatpush.msra.mxu0 0.0
  %143 = vmatpush.msra.mxu0 0.0
  %144 = vmatpush.msra.mxu0 0.0
  %145 = vmatpush.msra.mxu0 0.0
  %146 = vmatpush.msra.mxu0 0.0
  %147 = vmatpush.msra.mxu0 0.0
  %148 = vmatpush.msra.mxu0 0.0
  %149 = vmatpush.msra.mxu0 %v133
  %150 = vmatpush.msra.mxu0 %v132
  %151 = vmatpush.msra.mxu0 %v131
  %152 = vmatpush.msra.mxu0 %v130
  %153 = vmatpush.msra.mxu0 %v129
  %154 = vmatpush.msra.mxu0 %v128
  %155 = vmatpush.msra.mxu0 %v127
  %156 = vmatpush.msra.mxu0 %v126
  %157 = vmatmul.f32.gmra.mxu0 %v136
  %v158 = vpop.f32.mrf.mxu0
  %v159 = vadd.f32 0.0, %v158
  %160 = vmatmul.f32.gmra.mxu0 %v139
  %v161 = vpop.f32.mrf.mxu0
  %v162 = vadd.f32 0.0, %v161
  %163 = vdwg.mxu0
  %v165 = vsel %vm134, %v83, 0
  %v168 = vsel %vm134, %v86, 0
  %170 = vmatpush.msra.mxu0 0.0
  %171 = vmatpush.msra.mxu0 0.0
  %172 = vmatpush.msra.mxu0 0.0
  %173 = vmatpush.msra.mxu0 0.0
  %174 = vmatpush.msra.mxu0 0.0
  %175 = vmatpush.msra.mxu0 0.0
  %176 = vmatpush.msra.mxu0 0.0
  %177 = vmatpush.msra.mxu0 0.0
  %178 = vmatpush.msra.mxu0 %v124
  %179 = vmatpush.msra.mxu0 %v123
  %180 = vmatpush.msra.mxu0 %v122
  %181 = vmatpush.msra.mxu0 %v121
  %182 = vmatpush.msra.mxu0 %v120
  %183 = vmatpush.msra.mxu0 %v119
  %184 = vmatpush.msra.mxu0 %v118
  %185 = vmatpush.msra.mxu0 %v117
  %186 = vmatmul.f32.gmra.mxu0 %v165
  %v187 = vpop.f32.mrf.mxu0
  %v188 = vadd.f32 %v159, %v187
  %189 = vmatmul.f32.gmra.mxu0 %v168
  %v190 = vpop.f32.mrf.mxu0
  %v191 = vadd.f32 %v162, %v190
  %192 = vdwg.mxu0
  %s193 = scalar_lea.vmem %s4, 128
  %v194 = vld [vmem:[%s193] sm:$0xff]
  %v195 = vld [vmem:[%s193 + $0x8] sm:$0xff]
  %v196 = vld [vmem:[%s193 + $0x10] sm:$0xff]
  %v197 = vld [vmem:[%s193 + $0x18] sm:$0xff]
  %v198 = vld [vmem:[%s193 + $0x20] sm:$0xff]
  %v199 = vld [vmem:[%s193 + $0x28] sm:$0xff]
  %v200 = vld [vmem:[%s193 + $0x30] sm:$0xff]
  %v201 = vld [vmem:[%s193 + $0x38] sm:$0xff]
  %v203 = vsel %vm134, %v56, 0
  %v206 = vsel %vm134, %v57, 0
  %208 = vmatpush.msra.mxu0 0.0
  %209 = vmatpush.msra.mxu0 0.0
  %210 = vmatpush.msra.mxu0 0.0
  %211 = vmatpush.msra.mxu0 0.0
  %212 = vmatpush.msra.mxu0 0.0
  %213 = vmatpush.msra.mxu0 0.0
  %214 = vmatpush.msra.mxu0 0.0
  %215 = vmatpush.msra.mxu0 0.0
  %216 = vmatpush.msra.mxu0 %v201
  %217 = vmatpush.msra.mxu0 %v200
  %218 = vmatpush.msra.mxu0 %v199
  %219 = vmatpush.msra.mxu0 %v198
  %220 = vmatpush.msra.mxu0 %v197
  %221 = vmatpush.msra.mxu0 %v196
  %222 = vmatpush.msra.mxu0 %v195
  %223 = vmatpush.msra.mxu0 %v194
  %224 = vmatmul.f32.gmra.mxu0 %v203
  %v225 = vpop.f32.mrf.mxu0
  %v226 = vadd.f32 0.0, %v225
  %227 = vmatmul.f32.gmra.mxu0 %v206
  %v228 = vpop.f32.mrf.mxu0
  %v229 = vadd.f32 0.0, %v228
  %230 = vdwg.mxu0
  %v231 = vadd.f32 %v188, %v226
  %v232 = vadd.f32 %v191, %v229
  %s233 = scalar_lea.vmem %s4, 192
  %v234 = vld [vmem:[%s233] sm:$0xff]
  %v235 = vld [vmem:[%s233 + $0x8] sm:$0xff]
  %v236 = vld [vmem:[%s233 + $0x10] sm:$0xff]
  %v237 = vld [vmem:[%s233 + $0x18] sm:$0xff]
  %v238 = vld [vmem:[%s233 + $0x20] sm:$0xff]
  %v239 = vld [vmem:[%s233 + $0x28] sm:$0xff]
  %v240 = vld [vmem:[%s233 + $0x30] sm:$0xff]
  %v241 = vld [vmem:[%s233 + $0x38] sm:$0xff]
  %v243 = vsel %vm134, %v112, 0
  %v246 = vsel %vm134, %v115, 0
  %248 = vmatpush.msra.mxu0 0.0
  %249 = vmatpush.msra.mxu0 0.0
  %250 = vmatpush.msra.mxu0 0.0
  %251 = vmatpush.msra.mxu0 0.0
  %252 = vmatpush.msra.mxu0 0.0
  %253 = vmatpush.msra.mxu0 0.0
  %254 = vmatpush.msra.mxu0 0.0
  %255 = vmatpush.msra.mxu0 0.0
  %256 = vmatpush.msra.mxu0 %v241
  %257 = vmatpush.msra.mxu0 %v240
  %258 = vmatpush.msra.mxu0 %v239
  %259 = vmatpush.msra.mxu0 %v238
  %260 = vmatpush.msra.mxu0 %v237
  %261 = vmatpush.msra.mxu0 %v236
  %262 = vmatpush.msra.mxu0 %v235
  %263 = vmatpush.msra.mxu0 %v234
  %264 = vmatmul.f32.gmra.mxu0 %v243
  %v265 = vpop.f32.mrf.mxu0
  %v266 = vadd.f32 0.0, %v265
  %267 = vmatmul.f32.gmra.mxu0 %v246
  %v268 = vpop.f32.mrf.mxu0
  %v269 = vadd.f32 0.0, %v268
  %270 = vdwg.mxu0
  %v271 = vadd.f32 %v231, %v266
  %v272 = vadd.f32 %v232, %v269
  %v273 = vld [vmem:[%s5] sm:$0x1]
  %v275 = vperm.slane %v273, 0
  %v277 = vadd.f32 %v271, %v275
  %v278 = vadd.f32 %v272, %v275
  %v279 = vmax.f32 %v277, 0.0
  %v280 = vmax.f32 %v278, 0.0
  %281 = vmatpush.msra.mxu0 0.0
  %282 = vmatpush.msra.mxu0 0.0
  %283 = vmatpush.msra.mxu0 0.0
  %284 = vmatpush.msra.mxu0 0.0
  %285 = vmatpush.msra.mxu0 0.0
  %286 = vmatpush.msra.mxu0 0.0
  %287 = vmatpush.msra.mxu0 0.0
  %288 = vmatpush.msra.mxu0 0.0
  %289 = vmatpush.msra.mxu0 0.0
  %290 = vmatpush.msra.mxu0 0.0
  %291 = vmatpush.msra.mxu0 0.0
  %292 = vmatpush.msra.mxu0 0.0
  %293 = vmatpush.msra.mxu0 0.0
  %294 = vmatpush.msra.mxu0 0.0
  %295 = vmatpush.msra.mxu0 %v280
  %296 = vmatpush.msra.mxu0 %v279
  %297 = vmatmul.f32.gmra.mxu0 %v60
  %v298 = vpop.f32.mrf.mxu0
  %v299 = vadd.f32 0.0, %v298
  %300 = vmatmul.f32.gmra.mxu0 %v63
  %v301 = vpop.f32.mrf.mxu0
  %v302 = vadd.f32 0.0, %v301
  %303 = vdwg.mxu0
  %304 = vmatpush.msra.mxu0 0.0
  %305 = vmatpush.msra.mxu0 0.0
  %306 = vmatpush.msra.mxu0 0.0
  %307 = vmatpush.msra.mxu0 0.0
  %308 = vmatpush.msra.mxu0 0.0
  %309 = vmatpush.msra.mxu0 0.0
  %310 = vmatpush.msra.mxu0 0.0
  %311 = vmatpush.msra.mxu0 0.0
  %312 = vmatpush.msra.mxu0 0.0
  %313 = vmatpush.msra.mxu0 0.0
  %314 = vmatpush.msra.mxu0 0.0
  %315 = vmatpush.msra.mxu0 0.0
  %316 = vmatpush.msra.mxu0 0.0
  %317 = vmatpush.msra.mxu0 0.0
  %318 = vmatpush.msra.mxu0 %v280
  %319 = vmatpush.msra.mxu0 %v279
  %320 = vmatmul.f32.gmra.mxu0 %v89
  %v321 = vpop.f32.mrf.mxu0
  %v322 = vadd.f32 0.0, %v321
  %323 = vmatmul.f32.gmra.mxu0 %v92
  %v324 = vpop.f32.mrf.mxu0
  %v325 = vadd.f32 0.0, %v324
  %326 = vdwg.mxu0
  %v327 = vld [vmem:[%s7] sm:$0x1]
  %s328 = scalar_lea.vmem %s6, 64
  %v329 = vld [vmem:[%s328] sm:$0xff]
  %v330 = vld [vmem:[%s328 + $0x8] sm:$0xff]
  %v331 = vld [vmem:[%s328 + $0x10] sm:$0xff]
  %v332 = vld [vmem:[%s328 + $0x18] sm:$0xff]
  %v333 = vld [vmem:[%s328 + $0x20] sm:$0xff]
  %v334 = vld [vmem:[%s328 + $0x28] sm:$0xff]
  %v335 = vld [vmem:[%s328 + $0x30] sm:$0xff]
  %v336 = vld [vmem:[%s328 + $0x38] sm:$0xff]
  %s337 = scalar_lea.vmem %s6, 192
  %v338 = vld [vmem:[%s337] sm:$0xff]
  %v339 = vld [vmem:[%s337 + $0x8] sm:$0xff]
  %v340 = vld [vmem:[%s337 + $0x10] sm:$0xff]
  %v341 = vld [vmem:[%s337 + $0x18] sm:$0xff]
  %v342 = vld [vmem:[%s337 + $0x20] sm:$0xff]
  %v343 = vld [vmem:[%s337 + $0x28] sm:$0xff]
  %v344 = vld [vmem:[%s337 + $0x30] sm:$0xff]
  %v345 = vld [vmem:[%s337 + $0x38] sm:$0xff]
  %v347 = vsel %vm134, %v299, 0
  %v350 = vsel %vm134, %v302, 0
  %352 = vmatpush.msra.mxu0 0.0
  %353 = vmatpush.msra.mxu0 0.0
  %354 = vmatpush.msra.mxu0 0.0
  %355 = vmatpush.msra.mxu0 0.0
  %356 = vmatpush.msra.mxu0 0.0
  %357 = vmatpush.msra.mxu0 0.0
  %358 = vmatpush.msra.mxu0 0.0
  %359 = vmatpush.msra.mxu0 0.0
  %360 = vmatpush.msra.mxu0 %v345
  %361 = vmatpush.msra.mxu0 %v344
  %362 = vmatpush.msra.mxu0 %v343
  %363 = vmatpush.msra.mxu0 %v342
  %364 = vmatpush.msra.mxu0 %v341
  %365 = vmatpush.msra.mxu0 %v340
  %366 = vmatpush.msra.mxu0 %v339
  %367 = vmatpush.msra.mxu0 %v338
  %368 = vmatmul.f32.gmra.mxu0 %v347
  %v369 = vpop.f32.mrf.mxu0
  %v370 = vadd.f32 0.0, %v369
  %371 = vmatmul.f32.gmra.mxu0 %v350
  %v372 = vpop.f32.mrf.mxu0
  %v373 = vadd.f32 0.0, %v372
  %374 = vdwg.mxu0
  %v376 = vsel %vm134, %v279, 0
  %v379 = vsel %vm134, %v280, 0
  %381 = vmatpush.msra.mxu0 0.0
  %382 = vmatpush.msra.mxu0 0.0
  %383 = vmatpush.msra.mxu0 0.0
  %384 = vmatpush.msra.mxu0 0.0
  %385 = vmatpush.msra.mxu0 0.0
  %386 = vmatpush.msra.mxu0 0.0
  %387 = vmatpush.msra.mxu0 0.0
  %388 = vmatpush.msra.mxu0 0.0
  %389 = vmatpush.msra.mxu0 %v336
  %390 = vmatpush.msra.mxu0 %v335
  %391 = vmatpush.msra.mxu0 %v334
  %392 = vmatpush.msra.mxu0 %v333
  %393 = vmatpush.msra.mxu0 %v332
  %394 = vmatpush.msra.mxu0 %v331
  %395 = vmatpush.msra.mxu0 %v330
  %396 = vmatpush.msra.mxu0 %v329
  %397 = vmatmul.f32.gmra.mxu0 %v376
  %v398 = vpop.f32.mrf.mxu0
  %v399 = vadd.f32 %v370, %v398
  %400 = vmatmul.f32.gmra.mxu0 %v379
  %v401 = vpop.f32.mrf.mxu0
  %v402 = vadd.f32 %v373, %v401
  %403 = vdwg.mxu0
  %v405 = vperm.slane %v327, 0
  %v407 = vadd.f32 %v399, %v405
  %v408 = vadd.f32 %v402, %v405
  %s409 = scalar_lea.vmem %s6, 128
  %v410 = vld [vmem:[%s409] sm:$0xff]
  %v411 = vld [vmem:[%s409 + $0x8] sm:$0xff]
  %v412 = vld [vmem:[%s409 + $0x10] sm:$0xff]
  %v413 = vld [vmem:[%s409 + $0x18] sm:$0xff]
  %v414 = vld [vmem:[%s409 + $0x20] sm:$0xff]
  %v415 = vld [vmem:[%s409 + $0x28] sm:$0xff]
  %v416 = vld [vmem:[%s409 + $0x30] sm:$0xff]
  %v417 = vld [vmem:[%s409 + $0x38] sm:$0xff]
  %v418 = vld [vmem:[%s6] sm:$0xff]
  %v419 = vld [vmem:[%s6 + $0x8] sm:$0xff]
  %v420 = vld [vmem:[%s6 + $0x10] sm:$0xff]
  %v421 = vld [vmem:[%s6 + $0x18] sm:$0xff]
  %v422 = vld [vmem:[%s6 + $0x20] sm:$0xff]
  %v423 = vld [vmem:[%s6 + $0x28] sm:$0xff]
  %v424 = vld [vmem:[%s6 + $0x30] sm:$0xff]
  %v425 = vld [vmem:[%s6 + $0x38] sm:$0xff]
  %v427 = vsel %vm134, %v322, 0
  %v430 = vsel %vm134, %v325, 0
  %432 = vmatpush.msra.mxu0 0.0
  %433 = vmatpush.msra.mxu0 0.0
  %434 = vmatpush.msra.mxu0 0.0
  %435 = vmatpush.msra.mxu0 0.0
  %436 = vmatpush.msra.mxu0 0.0
  %437 = vmatpush.msra.mxu0 0.0
  %438 = vmatpush.msra.mxu0 0.0
  %439 = vmatpush.msra.mxu0 0.0
  %440 = vmatpush.msra.mxu0 %v425
  %441 = vmatpush.msra.mxu0 %v424
  %442 = vmatpush.msra.mxu0 %v423
  %443 = vmatpush.msra.mxu0 %v422
  %444 = vmatpush.msra.mxu0 %v421
  %445 = vmatpush.msra.mxu0 %v420
  %446 = vmatpush.msra.mxu0 %v419
  %447 = vmatpush.msra.mxu0 %v418
  %448 = vmatmul.f32.gmra.mxu0 %v427
  %v449 = vpop.f32.mrf.mxu0
  %v450 = vadd.f32 0.0, %v449
  %451 = vmatmul.f32.gmra.mxu0 %v430
  %v452 = vpop.f32.mrf.mxu0
  %v453 = vadd.f32 0.0, %v452
  %454 = vdwg.mxu0
  %455 = vmatpush.msra.mxu0 0.0
  %456 = vmatpush.msra.mxu0 0.0
  %457 = vmatpush.msra.mxu0 0.0
  %458 = vmatpush.msra.mxu0 0.0
  %459 = vmatpush.msra.mxu0 0.0
  %460 = vmatpush.msra.mxu0 0.0
  %461 = vmatpush.msra.mxu0 0.0
  %462 = vmatpush.msra.mxu0 0.0
  %463 = vmatpush.msra.mxu0 %v417
  %464 = vmatpush.msra.mxu0 %v416
  %465 = vmatpush.msra.mxu0 %v415
  %466 = vmatpush.msra.mxu0 %v414
  %467 = vmatpush.msra.mxu0 %v413
  %468 = vmatpush.msra.mxu0 %v412
  %469 = vmatpush.msra.mxu0 %v411
  %470 = vmatpush.msra.mxu0 %v410
  %471 = vmatmul.f32.gmra.mxu0 %v376
  %v472 = vpop.f32.mrf.mxu0
  %v473 = vadd.f32 %v450, %v472
  %474 = vmatmul.f32.gmra.mxu0 %v379
  %v475 = vpop.f32.mrf.mxu0
  %v476 = vadd.f32 %v453, %v475
  %477 = vdwg.mxu0
  %v478 = vadd.f32 %v473, %v405
  %v479 = vadd.f32 %v476, %v405
  %v480 = vld [vmem:[%s8] sm:$0xff]
  %v481 = vld [vmem:[%s8 + $0x8] sm:$0xff]
  %v482 = vld [vmem:[%s8 + $0x10] sm:$0xff]
  %v483 = vld [vmem:[%s8 + $0x18] sm:$0xff]
  %v484 = vld [vmem:[%s8 + $0x20] sm:$0xff]
  %v485 = vld [vmem:[%s8 + $0x28] sm:$0xff]
  %v486 = vld [vmem:[%s8 + $0x30] sm:$0xff]
  %v487 = vld [vmem:[%s8 + $0x38] sm:$0xff]
  %v488 = vsel %vm134, %v407, 0.0
  %v489 = vsel %vm134, %v408, 0.0
  %v490 = vadd.f32 %v488, %v489
  %v491 = vrot.slane %v490, 4
  %v492 = vadd.f32 %v490, %v491
  %v493 = vrot.slane %v492, 2
  %v494 = vadd.f32 %v492, %v493
  %v495 = vrot.slane %v494, 1
  %v496 = vadd.f32 %v494, %v495
  %v497 = vsel %vm134, %v478, 0.0
  %v498 = vsel %vm134, %v479, 0.0
  %v499 = vadd.f32 %v497, %v498
  %v500 = vrot.slane %v499, 4
  %v501 = vadd.f32 %v499, %v500
  %v502 = vrot.slane %v501, 2
  %v503 = vadd.f32 %v501, %v502
  %v504 = vrot.slane %v503, 1
  %v505 = vadd.f32 %v503, %v504
  %v506 = vadd.f32 %v496, %v505
  %v508 = vsel %vm134, %v506, 0
  %510 = vmatpush.msra.mxu0 0.0
  %511 = vmatpush.msra.mxu0 0.0
  %512 = vmatpush.msra.mxu0 0.0
  %513 = vmatpush.msra.mxu0 0.0
  %514 = vmatpush.msra.mxu0 0.0
  %515 = vmatpush.msra.mxu0 0.0
  %516 = vmatpush.msra.mxu0 0.0
  %517 = vmatpush.msra.mxu0 0.0
  %518 = vmatpush.msra.mxu0 %v487
  %519 = vmatpush.msra.mxu0 %v486
  %520 = vmatpush.msra.mxu0 %v485
  %521 = vmatpush.msra.mxu0 %v484
  %522 = vmatpush.msra.mxu0 %v483
  %523 = vmatpush.msra.mxu0 %v482
  %524 = vmatpush.msra.mxu0 %v481
  %525 = vmatpush.msra.mxu0 %v480
  %526 = vmatmul.f32.gmra.mxu0 %v508
  %v527 = vpop.f32.mrf.mxu0
  %v528 = vadd.f32 0.0, %v527
  %529 = vdwg.mxu0
  %v530 = vmul.f32 %v528, 0.001953125
  %v531 = vperm.slane %v530, 0
  %v532 = vsub.f32 %v407, %v531
  %v533 = vsub.f32 %v408, %v531
  %v534 = vsub.f32 %v478, %v531
  %v535 = vsub.f32 %v479, %v531
  %v536 = vmul.f32 %v532, %v532
  %v537 = vmul.f32 %v533, %v533
  %v538 = vsel %vm134, %v536, 0.0
  %v539 = vsel %vm134, %v537, 0.0
  %v540 = vadd.f32 %v538, %v539
  %v541 = vrot.slane %v540, 4
  %v542 = vadd.f32 %v540, %v541
  %v543 = vrot.slane %v542, 2
  %v544 = vadd.f32 %v542, %v543
  %v545 = vrot.slane %v544, 1
  %v546 = vadd.f32 %v544, %v545
  %v547 = vmul.f32 %v534, %v534
  %v548 = vmul.f32 %v535, %v535
  %v549 = vsel %vm134, %v547, 0.0
  %v550 = vsel %vm134, %v548, 0.0
  %v551 = vadd.f32 %v549, %v550
  %v552 = vrot.slane %v551, 4
  %v553 = vadd.f32 %v551, %v552
  %v554 = vrot.slane %v553, 2
  %v555 = vadd.f32 %v553, %v554
  %v556 = vrot.slane %v555, 1
  %v557 = vadd.f32 %v555, %v556
  %v558 = vadd.f32 %v546, %v557
  %v560 = vsel %vm134, %v558, 0
  %562 = vmatpush.msra.mxu0 0.0
  %563 = vmatpush.msra.mxu0 0.0
  %564 = vmatpush.msra.mxu0 0.0
  %565 = vmatpush.msra.mxu0 0.0
  %566 = vmatpush.msra.mxu0 0.0
  %567 = vmatpush.msra.mxu0 0.0
  %568 = vmatpush.msra.mxu0 0.0
  %569 = vmatpush.msra.mxu0 0.0
  %570 = vmatpush.msra.mxu0 %v487
  %571 = vmatpush.msra.mxu0 %v486
  %572 = vmatpush.msra.mxu0 %v485
  %573 = vmatpush.msra.mxu0 %v484
  %574 = vmatpush.msra.mxu0 %v483
  %575 = vmatpush.msra.mxu0 %v482
  %576 = vmatpush.msra.mxu0 %v481
  %577 = vmatpush.msra.mxu0 %v480
  %578 = vmatmul.f32.gmra.mxu0 %v560
  %v579 = vpop.f32.mrf.mxu0
  %v580 = vadd.f32 0.0, %v579
  %581 = vdwg.mxu0
  %v582 = vmul.f32 %v580, 0.001953125
  %v583 = vld [vmem:[%s9] sm:$0x1]
  %v584 = vadd.f32 %v582, 1e-05
  %v585 = vrsqrt.pop %v584
  %v586 = vmul.f32 %v585, %v584
  %v587 = vmul.f32 %v586, %v585
  %v588 = vmul.f32 0.5, %v587
  %v589 = vsub.f32 1.5, %v588
  %v590 = vmul.f32 %v585, %v589
  %vm591 = vweird.f32 %v584
  %vm592 = vweird.f32 %v585
  %vm593 = vmor %vm591, %vm592
  %v594 = vsel %vm593, %v585, %v590
  %v595 = vmul.f32 %v583, %v594
  %v596 = vld [vmem:[%s10] sm:$0x1]
  %v598 = vperm.slane %v595, 0
  %v600 = vmul.f32 %v532, %v598
  %v601 = vmul.f32 %v533, %v598
  %v603 = vperm.slane %v596, 0
  %v605 = vadd.f32 %v600, %v603
  %v606 = vadd.f32 %v601, %v603
  %607 = vst.msk [vmem:[%s11] sm:$0xff] %vm134, %v605
  %608 = vst.msk [vmem:[%s11 + $0x8] sm:$0xff] %vm134, %v606
  %v609 = vmul.f32 %v534, %v598
  %v610 = vmul.f32 %v535, %v598
  %v611 = vadd.f32 %v609, %v603
  %v612 = vadd.f32 %v610, %v603
  %615 = vrot.lane.b32.xlu0 %v611, 64
  %v616 = vpop.permute.xlu0 %615
  %617 = vrot.lane.b32.xlu0 %v612, 64
  %v618 = vpop.permute.xlu0 %617
  %vm621 = vcmask 1048064
  %622 = vst.msk [vmem:[%s11] sm:$0xff] %vm621, %v616
  %623 = vst.msk [vmem:[%s11 + $0x8] sm:$0xff] %vm621, %v618
  // Predicated region
  $region46: #{unet_block_forward.1} parent=0 // pred_check
    _
  $region47: #{unet_block_forward.1} parent=0 // pred_check_branch
    %625 = sbr.rel (0) target = $region49
  $region48: #{unet_block_forward.1} parent=0 // pred_region
    _
  $region49: #{unet_block_forward.1} parent=0 // pred_fallthru
    _
  // Predicated region
  $region50: #{unet_block_forward.1} parent=0 // pred_check
    _
  $region51: #{unet_block_forward.1} parent=0 // pred_check_branch
    %627 = sbr.rel (0) target = $region53
  $region52: #{unet_block_forward.1} parent=0 // pred_region
    _
  $region53: #{unet_block_forward.1} parent=0 // pred_fallthru
    _

</llo_original>
